<compile_context>
chip_gen: v7x
topology: tpu7x:2x2x1
jax: 0.10.0
libtpu: 0.0.40
codegen_flags: <defaults>
</compile_context>

<pallas_src>
import functools

import jax
import jax.numpy as jnp
from jax.experimental import pallas as pl
from jax.experimental.pallas import tpu as pltpu

ALPHA = 0.25
GAMMA = 2.0


def _focal_loss_kernel(preds_ref, labels_ref, out_ref, *, alpha, gamma):
    x = preds_ref[...]          # (N, C, HW) float32 logits
    lab = labels_ref[...]       # (N, 1, HW) int32 class ids

    n, c, hw = x.shape
    cls = jax.lax.broadcasted_iota(jnp.int32, (n, c, hw), 1)
    t = (cls == lab).astype(jnp.float32)                  # one-hot target, {0,1}

    # Stable BCE-with-logits (matches torch):  max(x,0) - x*t + log1p(exp(-|x|))
    e = jnp.exp(-jnp.abs(x))
    bce = jnp.maximum(x, 0.0) - x * t + jnp.log1p(e)

    # pt = exp(-bce) without a second exp: reuse e via the sigmoid identity.
    r = 1.0 / (1.0 + e)                                   # exact reciprocal
    p = jnp.where(x >= 0.0, r, e * r)                     # sigmoid(x)
    one_minus_pt = p + t * (1.0 - 2.0 * p)                # = 1 - pt  (FMA form)

    # alpha gather: alpha where t==0, (1-alpha) where t==1  (FMA form)
    at = alpha + t * (1.0 - 2.0 * alpha)

    # (1 - pt) ** gamma, honoring gamma (fast path for the default gamma == 2).
    if gamma == 2:
        mod = one_minus_pt * one_minus_pt
    elif float(gamma).is_integer() and gamma >= 0:
        mod = jnp.ones_like(one_minus_pt)
        for _ in range(int(gamma)):
            mod = mod * one_minus_pt
    else:
        mod = jnp.power(one_minus_pt, jnp.float32(gamma))

    f_loss = at * mod * bce                               # (N, C, HW)

    # Reduce only over N (leading-dim adds) and C (sublane reduce); keep the
    # lane axis dense.  Final scalar combine happens in the wrapper.
    part = jnp.sum(f_loss, axis=0)                        # (C, HW)
    out_ref[...] = jnp.sum(part, axis=0, keepdims=True)   # (1, HW)


def focal_loss(preds, labels, alpha=ALPHA, gamma=GAMMA):
    """preds: (N, C, H, W) float logits; labels: (N, H, W) int class ids."""
    N, C, H, W = preds.shape
    HW = H * W
    p = preds.reshape(N, C, HW).astype(jnp.float32)
    l = labels.reshape(N, 1, HW).astype(jnp.int32)

    kernel = functools.partial(_focal_loss_kernel, alpha=float(alpha), gamma=gamma)

    n_elem = N * C * HW
    cost = pl.CostEstimate(
        flops=20 * n_elem,
        transcendentals=3 * n_elem,              # exp, log1p, reciprocal
        bytes_accessed=p.size * 4 + l.size * 4 + HW * 4,
    )

    out = pl.pallas_call(
        kernel,
        out_shape=jax.ShapeDtypeStruct((1, HW), jnp.float32),
        grid_spec=pltpu.PrefetchScalarGridSpec(
            num_scalar_prefetch=0,
            grid=(1,),
            in_specs=[
                pl.BlockSpec((N, C, HW), lambda g: (0, 0, 0)),
                pl.BlockSpec((N, 1, HW), lambda g: (0, 0, 0)),
            ],
            out_specs=pl.BlockSpec((1, HW), lambda g: (0, 0)),
        ),
        compiler_params=pltpu.CompilerParams(
            dimension_semantics=("parallel",)),
        cost_estimate=cost,
    )(p, l)

    # Final tiny combine (sum of per-lane partials + mean scaling) in the wrapper.
    return jnp.sum(out) / jnp.float32(n_elem)


def _reference_focal_loss(preds, labels, alpha=ALPHA, gamma=GAMMA):
    """Pure-JAX reference of the PyTorch FocalLoss forward."""
    C = preds.shape[1]
    x = preds.astype(jnp.float32)
    t = jax.nn.one_hot(labels, C, axis=1, dtype=jnp.float32)       # (N,C,H,W)
    bce = jnp.maximum(x, 0.0) - x * t + jnp.log1p(jnp.exp(-jnp.abs(x)))
    at = jnp.where(t > 0.5, 1.0 - alpha, alpha)
    pt = jnp.exp(-bce)
    return jnp.mean(at * (1.0 - pt) ** gamma * bce)


if __name__ == "__main__":
    key = jax.random.PRNGKey(0)
    k1, k2 = jax.random.split(key)
    N, C, H, W = 2, 4, 16, 16
    preds = jax.random.normal(k1, (N, C, H, W), dtype=jnp.float32)
    labels = jax.random.randint(k2, (N, H, W), 0, C, dtype=jnp.int32)

    loss = jax.block_until_ready(focal_loss(preds, labels))
    ref = jax.block_until_ready(_reference_focal_loss(preds, labels))
    assert jnp.allclose(loss, ref, rtol=1e-5, atol=1e-5), (loss, ref)

    print("KERNEL_OK")
</pallas_src>

<mosaic_0001>
module attributes {stable_mosaic.version = 11 : i64} {
  func.func @_focal_loss_kernel(%arg0: i32, %arg1: memref<2x4x256xf32, #tpu.memory_space<vmem>>, %arg2: memref<2x1x256xi32, #tpu.memory_space<vmem>>, %arg3: memref<1x256xf32, #tpu.memory_space<vmem>>) attributes {dimension_semantics = [#tpu.dimension_semantics<parallel>], iteration_bounds = array<i64: 1>, scalar_prefetch = 0 : i64, scratch_operands = 0 : i64, tpu.core_type = #tpu.core_type<tc>, window_params = [{pipeline_mode = #tpu.pipeline_mode<synchronous>, transform_indices = @transform_0, window_bounds = array<i64: 2, 4, 256>}, {pipeline_mode = #tpu.pipeline_mode<synchronous>, transform_indices = @transform_1, window_bounds = array<i64: 2, 1, 256>}, {pipeline_mode = #tpu.pipeline_mode<synchronous>, transform_indices = @transform_2, window_bounds = array<i64: 1, 256>}]} {
    %c0 = arith.constant 0 : index
    %c0_0 = arith.constant 0 : index
    %c0_1 = arith.constant 0 : index
    %0 = vector.load %arg1[%c0, %c0_0, %c0_1] : memref<2x4x256xf32, #tpu.memory_space<vmem>>, vector<2x4x256xf32>
    %c0_2 = arith.constant 0 : index
    %c0_3 = arith.constant 0 : index
    %c0_4 = arith.constant 0 : index
    %1 = vector.load %arg2[%c0_2, %c0_3, %c0_4] : memref<2x1x256xi32, #tpu.memory_space<vmem>>, vector<2x1x256xi32>
    %2 = tpu.iota {dimensions = array<i32: 1>} : vector<2x4x256xi32>
    %3 = vector.broadcast %1 : vector<2x1x256xi32> to vector<2x4x256xi32>
    %4 = arith.cmpi eq, %2, %3 : vector<2x4x256xi32>
    %5 = arith.extui %4 : vector<2x4x256xi1> to vector<2x4x256xi32>
    %6 = arith.sitofp %5 : vector<2x4x256xi32> to vector<2x4x256xf32>
    %7 = math.absf %0 : vector<2x4x256xf32>
    %cst = arith.constant 0.000000e+00 : f32
    %8 = vector.broadcast %cst : f32 to vector<2x4x256xf32>
    %9 = arith.subf %8, %7 : vector<2x4x256xf32>
    %10 = math.exp %9 : vector<2x4x256xf32>
    %cst_5 = arith.constant 0.000000e+00 : f32
    %11 = vector.broadcast %cst_5 : f32 to vector<2x4x256xf32>
    %12 = arith.maximumf %0, %11 : vector<2x4x256xf32>
    %13 = arith.mulf %0, %6 : vector<2x4x256xf32>
    %14 = arith.subf %12, %13 : vector<2x4x256xf32>
    %15 = math.log1p %10 : vector<2x4x256xf32>
    %16 = arith.addf %14, %15 : vector<2x4x256xf32>
    %cst_6 = arith.constant 1.000000e+00 : f32
    %17 = vector.broadcast %cst_6 : f32 to vector<2x4x256xf32>
    %18 = arith.addf %17, %10 : vector<2x4x256xf32>
    %cst_7 = arith.constant 1.000000e+00 : f32
    %19 = vector.broadcast %cst_7 : f32 to vector<2x4x256xf32>
    %20 = arith.divf %19, %18 : vector<2x4x256xf32>
    %cst_8 = arith.constant 0.000000e+00 : f32
    %21 = vector.broadcast %cst_8 : f32 to vector<2x4x256xf32>
    %22 = arith.cmpf oge, %0, %21 : vector<2x4x256xf32>
    %23 = arith.mulf %10, %20 : vector<2x4x256xf32>
    %24 = arith.select %22, %20, %23 : vector<2x4x256xi1>, vector<2x4x256xf32>
    %cst_9 = arith.constant 2.000000e+00 : f32
    %25 = vector.broadcast %cst_9 : f32 to vector<2x4x256xf32>
    %26 = arith.mulf %25, %24 : vector<2x4x256xf32>
    %cst_10 = arith.constant 1.000000e+00 : f32
    %27 = vector.broadcast %cst_10 : f32 to vector<2x4x256xf32>
    %28 = arith.subf %27, %26 : vector<2x4x256xf32>
    %29 = arith.mulf %6, %28 : vector<2x4x256xf32>
    %30 = arith.addf %24, %29 : vector<2x4x256xf32>
    %cst_11 = arith.constant 5.000000e-01 : f32
    %31 = vector.broadcast %cst_11 : f32 to vector<2x4x256xf32>
    %32 = arith.mulf %6, %31 : vector<2x4x256xf32>
    %cst_12 = arith.constant 2.500000e-01 : f32
    %33 = vector.broadcast %cst_12 : f32 to vector<2x4x256xf32>
    %34 = arith.addf %33, %32 : vector<2x4x256xf32>
    %35 = arith.mulf %30, %30 : vector<2x4x256xf32>
    %36 = arith.mulf %34, %35 : vector<2x4x256xf32>
    %37 = arith.mulf %36, %16 : vector<2x4x256xf32>
    %cst_13 = arith.constant dense<0.000000e+00> : vector<4x256xf32>
    %38 = vector.multi_reduction <add>, %37, %cst_13 [0] : vector<2x4x256xf32> to vector<4x256xf32>
    %cst_14 = arith.constant dense<0.000000e+00> : vector<256xf32>
    %39 = vector.multi_reduction <add>, %38, %cst_14 [0] : vector<4x256xf32> to vector<256xf32>
    %40 = vector.shape_cast %39 : vector<256xf32> to vector<1x256xf32>
    %c0_15 = arith.constant 0 : index
    %c0_16 = arith.constant 0 : index
    %41 = vector.load %arg3[%c0_15, %c0_16] : memref<1x256xf32, #tpu.memory_space<vmem>>, vector<1x256xf32>
    tpu.vector_store %arg3[%c0_15, %c0_16], %40 {strides = array<i32>} : memref<1x256xf32, #tpu.memory_space<vmem>>, vector<1x256xf32>,
    return
  }
  func.func @transform_0(%arg0: i32) -> (i32, i32, i32) {
    %c0_i32 = arith.constant 0 : i32
    %c0_i32_0 = arith.constant 0 : i32
    %c0_i32_1 = arith.constant 0 : i32
    %c0_i32_2 = arith.constant 0 : i32
    return %c0_i32, %c0_i32_0, %c0_i32_1 : i32, i32, i32
  }
  func.func @transform_1(%arg0: i32) -> (i32, i32, i32) {
    %c0_i32 = arith.constant 0 : i32
    %c0_i32_0 = arith.constant 0 : i32
    %c0_i32_1 = arith.constant 0 : i32
    %c0_i32_2 = arith.constant 0 : i32
    return %c0_i32, %c0_i32_0, %c0_i32_1 : i32, i32, i32
  }
  func.func @transform_2(%arg0: i32) -> (i32, i32) {
    %c0_i32 = arith.constant 0 : i32
    %c0_i32_0 = arith.constant 0 : i32
    %c0_i32_1 = arith.constant 0 : i32
    return %c0_i32, %c0_i32_0 : i32, i32
  }
}

</mosaic_0001>

<llo_original>
// kernel: tpu_custom_call.1
$region0: #{tpu_custom_call.1}
  #allocation0 [shape = 'u32[]', space=smem, size = 0x4, offset = 0x4, fixed_abs, tag = 'smem constant byte address 0x4 - core index']
  #allocation1 [shape = 'u32[144,128]{1,0:T(1,128)}', space=vmem, size = 0x12000, scoped, tag = 'internal scratch']
  %s0 = inlined_call_operand.hbm [shape: f32[2,4,256], index: 0, kind: input, shape index: {}]
  %s1 = inlined_call_operand.hbm [shape: s32[2,1,256], index: 1, kind: input, shape index: {}]
  %s2 = inlined_call_operand.hbm [shape: f32[1,256], index: 2, kind: output, shape index: {}]
  %s3 = sld [smem:[#allocation0]]
  $region26: #{tpu_custom_call.1} parent=0
    _
  %s5 = ssub.s32 1, %s3
  %s6 = scalar_select 0, %s5, %s3
  $region1: #{tpu_custom_call.1} parent=0
    #allocation2 [shape = 'u8[8192]{0}', space=vmem, size = 0x2000, scoped, tag = 'input window, operand 0, single buffered']
    #allocation3 [shape = 's32[1]{0}', space=sflag, size = 0x4, scoped, tag = 'scoped memory for tpu_custom_call.1']
    #allocation4 [shape = 's32[1]{0}', space=sflag, size = 0x4, scoped, tag = 'scoped memory for tpu_custom_call.1']
    #allocation5 [shape = 'u8[2048]{0}', space=vmem, size = 0x800, scoped, tag = 'input window, operand 1, single buffered']
    #allocation6 [shape = 's32[1]{0}', space=sflag, size = 0x4, scoped, tag = 'scoped memory for tpu_custom_call.1']
    #allocation7 [shape = 'u8[1024]{0}', space=vmem, size = 0x400, scoped, tag = 'output window, operand 0, single buffered']
    %7 = vsyncpa [#allocation3], 0
    %8 = vsyncpa [#allocation6], 0
    %9 = vsyncpa [#allocation4], 0
    // Predicated region
    $region2: #{tpu_custom_call.1} parent=1 // pred_check
      _
    $region3: #{tpu_custom_call.1} parent=1 // pred_check_branch
      %11 = sbr.rel (0) target = $region5
    $region4: #{tpu_custom_call.1} parent=1 // pred_region
      %s13 = ssub.s32 256, 256
      %14 = vsyncadd [#allocation3], %s13
      %s15 = sshll.u32 [#allocation2], 4
      %s16 = int_to_ptr.vmem [resolvable:$true] %s15
      %21 = dma.hbm_to_vmem [thread:$0]  %s0, 256, %s16, [#allocation3], 128, 128, 8
    $region5: #{tpu_custom_call.1} parent=1 // pred_fallthru
      _
    // Predicated region
    $region6: #{tpu_custom_call.1} parent=1 // pred_check
      _
    $region7: #{tpu_custom_call.1} parent=1 // pred_check_branch
      %23 = sbr.rel (0) target = $region9
    $region8: #{tpu_custom_call.1} parent=1 // pred_region
      %s25 = ssub.s32 64, 64
      %26 = vsyncadd [#allocation6], %s25
      %s27 = sshll.u32 [#allocation5], 4
      %s28 = int_to_ptr.vmem [resolvable:$true] %s27
      %33 = dma.hbm_to_vmem [thread:$0]  %s1, 64, %s28, [#allocation6], 32, 32, 2
    $region9: #{tpu_custom_call.1} parent=1 // pred_fallthru
      _
    // Predicated region
    $region10: #{tpu_custom_call.1} parent=1 // pred_check
      _
    $region11: #{tpu_custom_call.1} parent=1 // pred_check_branch
      %35 = sbr.rel (0) target = $region13
    $region12: #{tpu_custom_call.1} parent=1 // pred_region
      %36 = dma.done [#allocation3], 256
    $region13: #{tpu_custom_call.1} parent=1 // pred_fallthru
      _
    // Predicated region
    $region14: #{tpu_custom_call.1} parent=1 // pred_check
      _
    $region15: #{tpu_custom_call.1} parent=1 // pred_check_branch
      %38 = sbr.rel (0) target = $region17
    $region16: #{tpu_custom_call.1} parent=1 // pred_region
      %39 = dma.done [#allocation6], 64
    $region17: #{tpu_custom_call.1} parent=1 // pred_fallthru
      _
    %v40 = vld [vmem:[#allocation2] sm:$0xff]
    %v41 = vld [vmem:[#allocation2 + $0x8] sm:$0xff]
    %v42 = vld [vmem:[#allocation5] sm:$0x3]
    %v43 = vld [vmem:[#allocation5 + $0x2] sm:$0x3]
    %v44 = vlaneseq
    %v45 = vshrl.u32 %v44, 7
    %v46 = vlaneseq
    %v47 = vshrl.u32 %v46, 7
    %v48 = vsub.s32 0, %v47
    %v49 = vrot.slane %v42, %v48
    %v50 = vlaneseq
    %v51 = vshrl.u32 %v50, 7
    %v52 = vsub.s32 1, %v51
    %v53 = vrot.slane %v42, %v52
    %v54 = vlaneseq
    %v55 = vshrl.u32 %v54, 7
    %v56 = vsub.s32 0, %v55
    %v57 = vrot.slane %v43, %v56
    %v58 = vlaneseq
    %v59 = vshrl.u32 %v58, 7
    %v60 = vsub.s32 1, %v59
    %v61 = vrot.slane %v43, %v60
    %vm62 = vcmp.eq.s32.totalorder %v45, %v49
    %vm63 = vcmp.eq.s32.totalorder %v45, %v53
    %vm64 = vcmp.eq.s32.totalorder %v45, %v57
    %vm65 = vcmp.eq.s32.totalorder %v45, %v61
    %v66 = vsel %vm62, 1, 0
    %v67 = vsel %vm63, 1, 0
    %v68 = vsel %vm64, 1, 0
    %v69 = vsel %vm65, 1, 0
    %v70 = vcvt.s32.f32 %v66
    %v71 = vcvt.s32.f32 %v67
    %v72 = vcvt.s32.f32 %v68
    %v73 = vcvt.s32.f32 %v69
    %v74 = vand.u32 2147483647, %v40
    %v75 = vand.u32 2147483647, %v41
    %v76 = vsub.f32 0.0, %v74
    %v77 = vsub.f32 0.0, %v75
    %v78 = vmul.f32 %v76, 1.442695
    %v79 = vpow.pop %v78
    %v80 = vmul.f32 %v77, 1.442695
    %v81 = vpow.pop %v80
    %v82 = vmax.f32 %v40, 0.0
    %v83 = vmax.f32 %v41, 0.0
    %v88 = vcombine.low %v70, %v71
    %v89 = vcombine.low %v72, %v73
    %v92 = vmul.f32 %v40, %v88
    %v93 = vmul.f32 %v41, %v89
    %v94 = vsub.f32 %v82, %v92
    %v95 = vsub.f32 %v83, %v93
    %v96 = vadd.f32 %v79, 1.0
    %v97 = vlog2.pop %v96
    %v98 = vmul.f32 %v97, 0.6931472
    %v99 = vmul.f32 -0.5, %v79
    %v100 = vadd.f32 %v99, 1.0
    %v101 = vmul.f32 %v100, %v79
    %v102 = vand.u32 2147483647, %v79
    %vm103 = vcmp.lt.f32.partialorder %v102, 0.0004427343
    %v104 = vsel %vm103, %v101, %v98
    %v105 = vadd.f32 %v81, 1.0
    %v106 = vlog2.pop %v105
    %v107 = vmul.f32 %v106, 0.6931472
    %v108 = vmul.f32 -0.5, %v81
    %v109 = vadd.f32 %v108, 1.0
    %v110 = vmul.f32 %v109, %v81
    %v111 = vand.u32 2147483647, %v81
    %vm112 = vcmp.lt.f32.partialorder %v111, 0.0004427343
    %v113 = vsel %vm112, %v110, %v107
    %v114 = vadd.f32 %v94, %v104
    %v115 = vadd.f32 %v95, %v113
    %v116 = vadd.f32 %v79, 1.0
    %v117 = vadd.f32 %v81, 1.0
    %v118 = vrcp.pop %v116
    %v119 = vmul.f32 1.0, %v118
    %v120 = vrcp.pop %v117
    %v121 = vmul.f32 1.0, %v120
    %vm122 = vcmp.ge.f32.partialorder %v40, 0.0
    %vm123 = vcmp.ge.f32.partialorder %v41, 0.0
    %v124 = vmul.f32 %v79, %v119
    %v125 = vmul.f32 %v81, %v121
    %v126 = vsel %vm122, %v119, %v124
    %v127 = vsel %vm123, %v121, %v125
    %v128 = vmul.f32 %v126, 2.0
    %v129 = vmul.f32 %v127, 2.0
    %v130 = vsub.f32 1.0, %v128
    %v131 = vsub.f32 1.0, %v129
    %v134 = vcombine.high %v130, %v130
    %v135 = vcombine.high %v131, %v131
    %v138 = vmul.f32 %v70, %v130
    %v139 = vmul.f32 %v71, %v134
    %v140 = vmul.f32 %v72, %v131
    %v141 = vmul.f32 %v73, %v135
    %v146 = vcombine.low %v138, %v139
    %v147 = vcombine.low %v140, %v141
    %v150 = vadd.f32 %v126, %v146
    %v151 = vadd.f32 %v127, %v147
    %v152 = vmul.f32 %v70, 0.5
    %v153 = vmul.f32 %v71, 0.5
    %v154 = vmul.f32 %v72, 0.5
    %v155 = vmul.f32 %v73, 0.5
    %v156 = vadd.f32 %v152, 0.25
    %v157 = vadd.f32 %v153, 0.25
    %v158 = vadd.f32 %v154, 0.25
    %v159 = vadd.f32 %v155, 0.25
    %v160 = vmul.f32 %v150, %v150
    %v161 = vmul.f32 %v151, %v151
    %v164 = vcombine.high %v160, %v160
    %v165 = vcombine.high %v161, %v161
    %v168 = vmul.f32 %v156, %v160
    %v169 = vmul.f32 %v157, %v164
    %v170 = vmul.f32 %v158, %v161
    %v171 = vmul.f32 %v159, %v165
    %v174 = vcombine.high %v114, %v114
    %v175 = vcombine.high %v115, %v115
    %v178 = vmul.f32 %v168, %v114
    %v179 = vmul.f32 %v169, %v174
    %v180 = vmul.f32 %v170, %v115
    %v181 = vmul.f32 %v171, %v175
    %vm182 = vcmask 1043456
    %v183 = vsel %vm182, %v178, 0.0
    %v184 = vsel %vm182, %v180, 0.0
    %v185 = vadd.f32 %v183, %v184
    %v186 = vsel %vm182, %v179, 0.0
    %v187 = vsel %vm182, %v181, 0.0
    %v188 = vadd.f32 %v186, %v187
    %v189 = vsel %vm182, %v185, 0.0
    %v190 = vrot.slane %v189, 4
    %v191 = vadd.f32 %v189, %v190
    %v192 = vrot.slane %v191, 2
    %v193 = vadd.f32 %v191, %v192
    %v194 = vrot.slane %v193, 1
    %v195 = vadd.f32 %v193, %v194
    %v196 = vsel %vm182, %v188, 0.0
    %v197 = vrot.slane %v196, 4
    %v198 = vadd.f32 %v196, %v197
    %v199 = vrot.slane %v198, 2
    %v200 = vadd.f32 %v198, %v199
    %v201 = vrot.slane %v200, 1
    %v202 = vadd.f32 %v200, %v201
    %v205 = vcombine.low %v195, %v202
    %v207 = vunpack.c.l.s4 1966171168
    %v208 = vunpack.c.0.s8 %v207
    %v209 = vlaneseq
    %v210 = vshrl.u32 %v209, 7
    %v211 = vsub.s32 %v208, %v210
    %v212 = vrot.slane %v205, %v211
    %v214 = vunpack.c.l.s4 1966171168
    %v215 = vunpack.c.0.s8 %v214
    %v216 = vlaneseq
    %v217 = vshrl.u32 %v216, 7
    %v218 = vsub.s32 %v215, %v217
    %v219 = vrot.slane %v212, %v218
    %v221 = vlaneseq
    %vm222 = vcmp.ge.s32.totalorder %v221, 0
    %vm223 = vcmp.lt.s32.totalorder %v221, 256
    %vm224 = vmand %vm222, %vm223
    %225 = vst.msk [vmem:[#allocation7] sm:$0x3] %vm224, %v219
    // Predicated region
    $region18: #{tpu_custom_call.1} parent=1 // pred_check
      _
    $region19: #{tpu_custom_call.1} parent=1 // pred_check_branch
      %227 = sbr.rel (0) target = $region21
    $region20: #{tpu_custom_call.1} parent=1 // pred_region
      %s229 = ssub.s32 32, 32
      %230 = vsyncadd [#allocation4], %s229
      %s232 = sshll.u32 [#allocation7], 4
      %s233 = int_to_ptr.vmem [resolvable:$true] %s232
      %235 = dma.vmem_to_hbm [thread:$0]  %s233, 32, %s2, [#allocation4]
    $region21: #{tpu_custom_call.1} parent=1 // pred_fallthru
      _
    // Predicated region
    $region22: #{tpu_custom_call.1} parent=1 // pred_check
      _
    $region23: #{tpu_custom_call.1} parent=1 // pred_check_branch
      %237 = sbr.rel (0) target = $region25
    $region24: #{tpu_custom_call.1} parent=1 // pred_region
      %238 = dma.done [#allocation4], 32
    $region25: #{tpu_custom_call.1} parent=1 // pred_fallthru
      _
    %239 = vsyncpa [#allocation3], 1
    %240 = vsyncpa [#allocation6], 1
    %241 = vsyncpa [#allocation4], 1

</llo_original>
